<compile_context>
chip_gen: v7x
topology: tpu7x:2x2x1
jax: 0.10.0
libtpu: 0.0.40
codegen_flags: <defaults>
</compile_context>

<pallas_src>
import functools

import jax
import jax.numpy as jnp
from jax.experimental import pallas as pl
from jax.experimental.pallas import tpu as pltpu


def _kdam_kernel(ys_ref, yt_ref, inter_ref, stats_ref,
                 inter_acc, sp_acc, sq_acc, spq_acc, spp_acc, sqq_acc,
                 *, steps_per_core, tl, acc_w, l_total, apply_softmax):
    core = pl.program_id(0)
    ni = pl.program_id(1)
    j = pl.program_id(2)

    @pl.when((ni == 0) & (j == 0))
    def _init():
        inter_acc[...] = jnp.zeros_like(inter_acc)
        sp_acc[...] = jnp.zeros_like(sp_acc)
        sq_acc[...] = jnp.zeros_like(sq_acc)
        spq_acc[...] = jnp.zeros_like(spq_acc)
        spp_acc[...] = jnp.zeros_like(spp_acc)
        sqq_acc[...] = jnp.zeros_like(sqq_acc)

    # Pixel-validity mask: covers both the ragged tail of L and whole tiles
    # that fall past the end when the per-core split over-runs.  Applied only
    # at the accumulation points (cheaper, and still drops NaN/garbage padding
    # because jnp.where selects the 0.0 branch there).
    tile = core * steps_per_core + j
    lane = jax.lax.broadcasted_iota(jnp.int32, (1, tl), 1)
    mask = (tile * tl + lane) < l_total                        # (1, tl)

    ys = ys_ref[0].astype(jnp.float32)                         # (C, tl)
    yt = yt_ref[0].astype(jnp.float32)

    if apply_softmax:
        es = jnp.exp(ys - jnp.max(ys, axis=0, keepdims=True))
        p = es * (1.0 / jnp.sum(es, axis=0, keepdims=True))
        et = jnp.exp(yt - jnp.max(yt, axis=0, keepdims=True))
        q = et * (1.0 / jnp.sum(et, axis=0, keepdims=True))
        # Softmax columns already sum to one -> skip the redundant renorm.
        pr, qr = p, q
    else:
        p, q = ys, yt
        pr = p / jnp.sum(p, axis=0, keepdims=True)
        qr = q / jnp.sum(q, axis=0, keepdims=True)

    # ---- inter term: per-pixel CS divergence over the class (sublane) axis --
    pq = jnp.sum(pr * qr, axis=0, keepdims=True)
    pp = jnp.sum(pr * pr, axis=0, keepdims=True)
    qq = jnp.sum(qr * qr, axis=0, keepdims=True)
    cs = -jnp.log(pq / (jnp.sqrt(pp * qq) + 1e-8) + 1e-8)      # (1, tl)
    inter_acc[...] += jnp.where(mask, cs, 0.0)

    # ---- intra term: per-class statistics, fused lane-wise fold -------------
    pm = jnp.where(mask, p, 0.0)                               # zero padded px
    qm = jnp.where(mask, q, 0.0)

    sp = pm[:, 0:acc_w]
    sq = qm[:, 0:acc_w]
    spq = sp * sq
    spp = sp * sp
    sqq = sq * sq
    for s in range(1, tl // acc_w):                            # static unroll
        ps = pm[:, s * acc_w:(s + 1) * acc_w]
        qs = qm[:, s * acc_w:(s + 1) * acc_w]
        sp = sp + ps
        sq = sq + qs
        spq = spq + ps * qs
        spp = spp + ps * ps
        sqq = sqq + qs * qs

    sp_acc[...] += sp
    sq_acc[...] += sq
    spq_acc[...] += spq
    spp_acc[...] += spp
    sqq_acc[...] += sqq

    @pl.when((ni == pl.num_programs(1) - 1) & (j == pl.num_programs(2) - 1))
    def _finalize():
        inter_ref[0] = inter_acc[...]
        stats_ref[0, 0] = sp_acc[...]
        stats_ref[0, 1] = sq_acc[...]
        stats_ref[0, 2] = spq_acc[...]
        stats_ref[0, 3] = spp_acc[...]
        stats_ref[0, 4] = sqq_acc[...]


def kdam_loss(y_s, y_t, alpha=1.0, beta=1.0, tl=8192, num_cores=2):
    """Pallas implementation of KDAM.forward for 4-D NCHW inputs."""
    # TODO(synk): the 2-D branch of the torch forward references an undefined
    # `num_classes` (only the 4-D path is well-defined); only 4-D implemented.
    assert y_s.ndim == 4 and y_t.ndim == 4 and y_s.shape == y_t.shape
    n, c, h, w = y_s.shape
    l_total = h * w
    m_total = n * l_total
    apply_softmax = (c != 1)

    ys3 = y_s.reshape(n, c, l_total)     # metadata-only reshape, no transpose
    yt3 = y_t.reshape(n, c, l_total)

    # ---- pixel-tile size: multiple of 128, VMEM-budgeted ---------------------
    in_bytes = jnp.dtype(y_s.dtype).itemsize
    vmem_budget = 6 * 1024 * 1024        # 2 inputs x 2 pipeline buffers
    tl_cap = max(128, ((vmem_budget // (4 * c * in_bytes)) // 128) * 128)
    if l_total >= 128:
        l_floor = (l_total // 128) * 128
        tl = min(max(128, (tl // 128) * 128), tl_cap, l_floor)
    else:
        tl = l_total
    acc_w = min(128, tl)

    n_l_tiles = pl.cdiv(l_total, tl)
    num_cores = max(1, min(num_cores, n_l_tiles))
    spc = pl.cdiv(n_l_tiles, num_cores)  # pixel tiles handled per core

    kernel = functools.partial(
        _kdam_kernel, steps_per_core=spc, tl=tl, acc_w=acc_w,
        l_total=l_total, apply_softmax=apply_softmax)

    def in_map(core, ni, j):
        lt = jnp.minimum(core * spc + j, n_l_tiles - 1)
        return (ni, 0, lt)

    inter_part, stats_part = pl.pallas_call(
        kernel,
        out_shape=(jax.ShapeDtypeStruct((num_cores, 1, tl), jnp.float32),
                   jax.ShapeDtypeStruct((num_cores, 5, c, acc_w), jnp.float32)),
        grid_spec=pltpu.PrefetchScalarGridSpec(
            num_scalar_prefetch=0,
            grid=(num_cores, n, spc),
            in_specs=[pl.BlockSpec((1, c, tl), in_map),
                      pl.BlockSpec((1, c, tl), in_map)],
            out_specs=(
                pl.BlockSpec((1, 1, tl), lambda core, ni, j: (core, 0, 0)),
                pl.BlockSpec((1, 5, c, acc_w),
                             lambda core, ni, j: (core, 0, 0, 0)),
            ),
            scratch_shapes=[
                pltpu.VMEM((1, tl), jnp.float32),      # inter lane-partials
                pltpu.VMEM((c, acc_w), jnp.float32),   # sum p     per class
                pltpu.VMEM((c, acc_w), jnp.float32),   # sum q     per class
                pltpu.VMEM((c, acc_w), jnp.float32),   # sum p*q   per class
                pltpu.VMEM((c, acc_w), jnp.float32),   # sum p*p   per class
                pltpu.VMEM((c, acc_w), jnp.float32),   # sum q*q   per class
            ],
        ),
        compiler_params=pltpu.CompilerParams(
            dimension_semantics=("parallel", "arbitrary", "arbitrary"),
            vmem_limit_bytes=32 * 1024 * 1024,
        ),
    )(ys3, yt3)

    # ---- tiny nonlinear finalize in plain JAX --------------------------------
    inter_loss = jnp.sum(inter_part) / m_total

    sp = jnp.sum(stats_part[:, 0], axis=(0, 2))
    sq = jnp.sum(stats_part[:, 1], axis=(0, 2))
    spq = jnp.sum(stats_part[:, 2], axis=(0, 2))
    spp = jnp.sum(stats_part[:, 3], axis=(0, 2))
    sqq = jnp.sum(stats_part[:, 4], axis=(0, 2))

    pq_d = spq / (sp * sq)
    pp_d = spp / (sp * sp)
    qq_d = sqq / (sq * sq)
    cs_col = -jnp.log(pq_d / (jnp.sqrt(pp_d * qq_d) + 1e-8) + 1e-8)
    intra_loss = jnp.mean(cs_col)

    return alpha * inter_loss + beta * intra_loss


# ---------------- pure-JAX reference (mirrors the torch code) ----------------
def _cs_divergence_ref(p, q):
    p = p / jnp.sum(p, axis=1, keepdims=True)
    q = q / jnp.sum(q, axis=1, keepdims=True)
    pq = jnp.sum(p * q, axis=1)
    pp = jnp.sum(p * p, axis=1)
    qq = jnp.sum(q * q, axis=1)
    return jnp.mean(-jnp.log(pq / (jnp.sqrt(pp * qq) + 1e-8) + 1e-8))


def kdam_ref(y_s, y_t, alpha=1.0, beta=1.0):
    c = y_s.shape[1]
    ys = jnp.transpose(y_s, (0, 3, 2, 1)).reshape(-1, c)
    yt = jnp.transpose(y_t, (0, 3, 2, 1)).reshape(-1, c)
    if c != 1:
        ys = jax.nn.softmax(ys, axis=1)
        yt = jax.nn.softmax(yt, axis=1)
    inter = _cs_divergence_ref(ys, yt)
    intra = _cs_divergence_ref(ys.T, yt.T)
    return alpha * inter + beta * intra


if __name__ == "__main__":
    key = jax.random.PRNGKey(0)
    k1, k2 = jax.random.split(key)
    # KDAM has no learnable parameters; alpha=beta=1.0 (defaults).
    y_s = jax.random.normal(k1, (2, 4, 16, 16), dtype=jnp.float32)  # NCHW
    y_t = jax.random.normal(k2, (2, 4, 16, 16), dtype=jnp.float32)

    loss = jax.block_until_ready(kdam_loss(y_s, y_t, alpha=1.0, beta=1.0))
    ref = kdam_ref(y_s, y_t, alpha=1.0, beta=1.0)
    assert jnp.allclose(loss, ref, rtol=1e-5, atol=1e-5), (loss, ref)

    # Ragged pixel count + two-way core split + tail masking path.
    k3, k4 = jax.random.split(k1)
    y_s2 = jax.random.normal(k3, (2, 4, 15, 9), dtype=jnp.float32)
    y_t2 = jax.random.normal(k4, (2, 4, 15, 9), dtype=jnp.float32)
    loss2 = jax.block_until_ready(kdam_loss(y_s2, y_t2, tl=128))
    ref2 = kdam_ref(y_s2, y_t2)
    assert jnp.allclose(loss2, ref2, rtol=1e-5, atol=1e-5), (loss2, ref2)

    print("KERNEL_OK")
</pallas_src>

<mosaic_0001>
module attributes {stable_mosaic.version = 11 : i64} {
  func.func @_kdam_kernel(%arg0: i32, %arg1: i32, %arg2: i32, %arg3: memref<1x4x256xf32, #tpu.memory_space<vmem>>, %arg4: memref<1x4x256xf32, #tpu.memory_space<vmem>>, %arg5: memref<1x1x256xf32, #tpu.memory_space<vmem>>, %arg6: memref<1x5x4x128xf32, #tpu.memory_space<vmem>>, %arg7: memref<1x256xf32, #tpu.memory_space<vmem>>, %arg8: memref<4x128xf32, #tpu.memory_space<vmem>>, %arg9: memref<4x128xf32, #tpu.memory_space<vmem>>, %arg10: memref<4x128xf32, #tpu.memory_space<vmem>>, %arg11: memref<4x128xf32, #tpu.memory_space<vmem>>, %arg12: memref<4x128xf32, #tpu.memory_space<vmem>>) attributes {dimension_semantics = [#tpu.dimension_semantics<parallel>, #tpu.dimension_semantics<arbitrary>, #tpu.dimension_semantics<arbitrary>], iteration_bounds = array<i64: 1, 2, 1>, scalar_prefetch = 0 : i64, scratch_operands = 6 : i64, tpu.core_type = #tpu.core_type<tc>, window_params = [{transform_indices = @transform_0, window_bounds = array<i64: 1, 4, 256>}, {transform_indices = @transform_1, window_bounds = array<i64: 1, 4, 256>}, {transform_indices = @transform_2, window_bounds = array<i64: 1, 1, 256>}, {transform_indices = @transform_3, window_bounds = array<i64: 1, 5, 4, 128>}]} {
    %c0_i32 = arith.constant 0 : i32
    %0 = arith.cmpi eq, %arg1, %c0_i32 : i32
    %c0_i32_0 = arith.constant 0 : i32
    %1 = arith.cmpi eq, %arg2, %c0_i32_0 : i32
    %2 = arith.andi %0, %1 : i1
    %3 = arith.extui %2 : i1 to i32
    %c0_i32_1 = arith.constant 0 : i32
    %4 = arith.cmpi ne, %3, %c0_i32_1 : i32
    scf.if %4 {
      %cst_49 = arith.constant 0.000000e+00 : f32
      %106 = vector.broadcast %cst_49 : f32 to vector<1x256xf32>
      %c0_50 = arith.constant 0 : index
      %c0_51 = arith.constant 0 : index
      %107 = vector.load %arg7[%c0_50, %c0_51] : memref<1x256xf32, #tpu.memory_space<vmem>>, vector<1x256xf32>
      tpu.vector_store %arg7[%c0_50, %c0_51], %106 {strides = array<i32>} : memref<1x256xf32, #tpu.memory_space<vmem>>, vector<1x256xf32>,
      %cst_52 = arith.constant 0.000000e+00 : f32
      %108 = vector.broadcast %cst_52 : f32 to vector<4x128xf32>
      %c0_53 = arith.constant 0 : index
      %c0_54 = arith.constant 0 : index
      %109 = vector.load %arg8[%c0_53, %c0_54] : memref<4x128xf32, #tpu.memory_space<vmem>>, vector<4x128xf32>
      tpu.vector_store %arg8[%c0_53, %c0_54], %108 {strides = array<i32>} : memref<4x128xf32, #tpu.memory_space<vmem>>, vector<4x128xf32>,
      %cst_55 = arith.constant 0.000000e+00 : f32
      %110 = vector.broadcast %cst_55 : f32 to vector<4x128xf32>
      %c0_56 = arith.constant 0 : index
      %c0_57 = arith.constant 0 : index
      %111 = vector.load %arg9[%c0_56, %c0_57] : memref<4x128xf32, #tpu.memory_space<vmem>>, vector<4x128xf32>
      tpu.vector_store %arg9[%c0_56, %c0_57], %110 {strides = array<i32>} : memref<4x128xf32, #tpu.memory_space<vmem>>, vector<4x128xf32>,
      %cst_58 = arith.constant 0.000000e+00 : f32
      %112 = vector.broadcast %cst_58 : f32 to vector<4x128xf32>
      %c0_59 = arith.constant 0 : index
      %c0_60 = arith.constant 0 : index
      %113 = vector.load %arg10[%c0_59, %c0_60] : memref<4x128xf32, #tpu.memory_space<vmem>>, vector<4x128xf32>
      tpu.vector_store %arg10[%c0_59, %c0_60], %112 {strides = array<i32>} : memref<4x128xf32, #tpu.memory_space<vmem>>, vector<4x128xf32>,
      %cst_61 = arith.constant 0.000000e+00 : f32
      %114 = vector.broadcast %cst_61 : f32 to vector<4x128xf32>
      %c0_62 = arith.constant 0 : index
      %c0_63 = arith.constant 0 : index
      %115 = vector.load %arg11[%c0_62, %c0_63] : memref<4x128xf32, #tpu.memory_space<vmem>>, vector<4x128xf32>
      tpu.vector_store %arg11[%c0_62, %c0_63], %114 {strides = array<i32>} : memref<4x128xf32, #tpu.memory_space<vmem>>, vector<4x128xf32>,
      %cst_64 = arith.constant 0.000000e+00 : f32
      %116 = vector.broadcast %cst_64 : f32 to vector<4x128xf32>
      %c0_65 = arith.constant 0 : index
      %c0_66 = arith.constant 0 : index
      %117 = vector.load %arg12[%c0_65, %c0_66] : memref<4x128xf32, #tpu.memory_space<vmem>>, vector<4x128xf32>
      tpu.vector_store %arg12[%c0_65, %c0_66], %116 {strides = array<i32>} : memref<4x128xf32, #tpu.memory_space<vmem>>, vector<4x128xf32>,
    } else {
    }
    %c1_i32 = arith.constant 1 : i32
    %5 = arith.muli %arg0, %c1_i32 : i32
    %6 = arith.addi %5, %arg2 : i32
    %7 = tpu.iota {dimensions = array<i32: 1>} : vector<1x256xi32>
    %c256_i32 = arith.constant 256 : i32
    %8 = arith.muli %6, %c256_i32 : i32
    %9 = vector.broadcast %8 : i32 to vector<1x256xi32>
    %10 = arith.addi %9, %7 : vector<1x256xi32>
    %c256_i32_2 = arith.constant 256 : i32
    %11 = vector.broadcast %c256_i32_2 : i32 to vector<1x256xi32>
    %12 = arith.cmpi slt, %10, %11 : vector<1x256xi32>
    %c0 = arith.constant 0 : index
    %c0_3 = arith.constant 0 : index
    %c0_4 = arith.constant 0 : index
    %13 = vector.load %arg3[%c0, %c0_3, %c0_4] : memref<1x4x256xf32, #tpu.memory_space<vmem>>, vector<1x4x256xf32>
    %14 = vector.shape_cast %13 : vector<1x4x256xf32> to vector<4x256xf32>
    %c0_5 = arith.constant 0 : index
    %c0_6 = arith.constant 0 : index
    %c0_7 = arith.constant 0 : index
    %15 = vector.load %arg4[%c0_5, %c0_6, %c0_7] : memref<1x4x256xf32, #tpu.memory_space<vmem>>, vector<1x4x256xf32>
    %16 = vector.shape_cast %15 : vector<1x4x256xf32> to vector<4x256xf32>
    %cst = arith.constant dense<0xFF800000> : vector<256xf32>
    %17 = vector.multi_reduction <maximumf>, %14, %cst [0] : vector<4x256xf32> to vector<256xf32>
    %18 = vector.shape_cast %17 : vector<256xf32> to vector<1x256xf32>
    %19 = vector.broadcast %18 : vector<1x256xf32> to vector<4x256xf32>
    %20 = arith.subf %14, %19 : vector<4x256xf32>
    %21 = math.exp %20 : vector<4x256xf32>
    %cst_8 = arith.constant dense<0.000000e+00> : vector<256xf32>
    %22 = vector.multi_reduction <add>, %21, %cst_8 [0] : vector<4x256xf32> to vector<256xf32>
    %23 = vector.shape_cast %22 : vector<256xf32> to vector<1x256xf32>
    %cst_9 = arith.constant 1.000000e+00 : f32
    %24 = vector.broadcast %cst_9 : f32 to vector<1x256xf32>
    %25 = arith.divf %24, %23 : vector<1x256xf32>
    %26 = vector.broadcast %25 : vector<1x256xf32> to vector<4x256xf32>
    %27 = arith.mulf %21, %26 : vector<4x256xf32>
    %cst_10 = arith.constant dense<0xFF800000> : vector<256xf32>
    %28 = vector.multi_reduction <maximumf>, %16, %cst_10 [0] : vector<4x256xf32> to vector<256xf32>
    %29 = vector.shape_cast %28 : vector<256xf32> to vector<1x256xf32>
    %30 = vector.broadcast %29 : vector<1x256xf32> to vector<4x256xf32>
    %31 = arith.subf %16, %30 : vector<4x256xf32>
    %32 = math.exp %31 : vector<4x256xf32>
    %cst_11 = arith.constant dense<0.000000e+00> : vector<256xf32>
    %33 = vector.multi_reduction <add>, %32, %cst_11 [0] : vector<4x256xf32> to vector<256xf32>
    %34 = vector.shape_cast %33 : vector<256xf32> to vector<1x256xf32>
    %cst_12 = arith.constant 1.000000e+00 : f32
    %35 = vector.broadcast %cst_12 : f32 to vector<1x256xf32>
    %36 = arith.divf %35, %34 : vector<1x256xf32>
    %37 = vector.broadcast %36 : vector<1x256xf32> to vector<4x256xf32>
    %38 = arith.mulf %32, %37 : vector<4x256xf32>
    %39 = arith.mulf %27, %38 : vector<4x256xf32>
    %cst_13 = arith.constant dense<0.000000e+00> : vector<256xf32>
    %40 = vector.multi_reduction <add>, %39, %cst_13 [0] : vector<4x256xf32> to vector<256xf32>
    %41 = vector.shape_cast %40 : vector<256xf32> to vector<1x256xf32>
    %42 = arith.mulf %27, %27 : vector<4x256xf32>
    %cst_14 = arith.constant dense<0.000000e+00> : vector<256xf32>
    %43 = vector.multi_reduction <add>, %42, %cst_14 [0] : vector<4x256xf32> to vector<256xf32>
    %44 = vector.shape_cast %43 : vector<256xf32> to vector<1x256xf32>
    %45 = arith.mulf %38, %38 : vector<4x256xf32>
    %cst_15 = arith.constant dense<0.000000e+00> : vector<256xf32>
    %46 = vector.multi_reduction <add>, %45, %cst_15 [0] : vector<4x256xf32> to vector<256xf32>
    %47 = vector.shape_cast %46 : vector<256xf32> to vector<1x256xf32>
    %48 = arith.mulf %44, %47 : vector<1x256xf32>
    %49 = math.sqrt %48 : vector<1x256xf32>
    %cst_16 = arith.constant 9.99999993E-9 : f32
    %50 = vector.broadcast %cst_16 : f32 to vector<1x256xf32>
    %51 = arith.addf %49, %50 : vector<1x256xf32>
    %52 = arith.divf %41, %51 : vector<1x256xf32>
    %cst_17 = arith.constant 9.99999993E-9 : f32
    %53 = vector.broadcast %cst_17 : f32 to vector<1x256xf32>
    %54 = arith.addf %52, %53 : vector<1x256xf32>
    %55 = math.log %54 : vector<1x256xf32>
    %cst_18 = arith.constant 0.000000e+00 : f32
    %56 = vector.broadcast %cst_18 : f32 to vector<1x256xf32>
    %57 = arith.subf %56, %55 : vector<1x256xf32>
    %c0_19 = arith.constant 0 : index
    %c0_20 = arith.constant 0 : index
    %58 = vector.load %arg7[%c0_19, %c0_20] : memref<1x256xf32, #tpu.memory_space<vmem>>, vector<1x256xf32>
    %cst_21 = arith.constant 0.000000e+00 : f32
    %59 = vector.broadcast %cst_21 : f32 to vector<1x256xf32>
    %60 = arith.select %12, %57, %59 : vector<1x256xi1>, vector<1x256xf32>
    %61 = arith.addf %58, %60 : vector<1x256xf32>
    %c0_22 = arith.constant 0 : index
    %c0_23 = arith.constant 0 : index
    %62 = vector.load %arg7[%c0_22, %c0_23] : memref<1x256xf32, #tpu.memory_space<vmem>>, vector<1x256xf32>
    tpu.vector_store %arg7[%c0_22, %c0_23], %61 {strides = array<i32>} : memref<1x256xf32, #tpu.memory_space<vmem>>, vector<1x256xf32>,
    %cst_24 = arith.constant 0.000000e+00 : f32
    %63 = vector.shape_cast %12 : vector<1x256xi1> to vector<1x256xi1>
    %64 = vector.broadcast %63 : vector<1x256xi1> to vector<4x256xi1>
    %65 = vector.broadcast %cst_24 : f32 to vector<4x256xf32>
    %66 = arith.select %64, %27, %65 : vector<4x256xi1>, vector<4x256xf32>
    %cst_25 = arith.constant 0.000000e+00 : f32
    %67 = vector.shape_cast %12 : vector<1x256xi1> to vector<1x256xi1>
    %68 = vector.broadcast %67 : vector<1x256xi1> to vector<4x256xi1>
    %69 = vector.broadcast %cst_25 : f32 to vector<4x256xf32>
    %70 = arith.select %68, %38, %69 : vector<4x256xi1>, vector<4x256xf32>
    %71 = vector.extract_strided_slice %66 {offsets = [0, 0], sizes = [4, 128], strides = [1, 1]} : vector<4x256xf32> to vector<4x128xf32>
    %72 = vector.extract_strided_slice %70 {offsets = [0, 0], sizes = [4, 128], strides = [1, 1]} : vector<4x256xf32> to vector<4x128xf32>
    %73 = arith.mulf %71, %72 : vector<4x128xf32>
    %74 = arith.mulf %71, %71 : vector<4x128xf32>
    %75 = arith.mulf %72, %72 : vector<4x128xf32>
    %76 = vector.extract_strided_slice %66 {offsets = [0, 128], sizes = [4, 128], strides = [1, 1]} : vector<4x256xf32> to vector<4x128xf32>
    %77 = vector.extract_strided_slice %70 {offsets = [0, 128], sizes = [4, 128], strides = [1, 1]} : vector<4x256xf32> to vector<4x128xf32>
    %78 = arith.addf %71, %76 : vector<4x128xf32>
    %79 = arith.addf %72, %77 : vector<4x128xf32>
    %80 = arith.mulf %76, %77 : vector<4x128xf32>
    %81 = arith.addf %73, %80 : vector<4x128xf32>
    %82 = arith.mulf %76, %76 : vector<4x128xf32>
    %83 = arith.addf %74, %82 : vector<4x128xf32>
    %84 = arith.mulf %77, %77 : vector<4x128xf32>
    %85 = arith.addf %75, %84 : vector<4x128xf32>
    %c0_26 = arith.constant 0 : index
    %c0_27 = arith.constant 0 : index
    %86 = vector.load %arg8[%c0_26, %c0_27] : memref<4x128xf32, #tpu.memory_space<vmem>>, vector<4x128xf32>
    %87 = arith.addf %86, %78 : vector<4x128xf32>
    %c0_28 = arith.constant 0 : index
    %c0_29 = arith.constant 0 : index
    %88 = vector.load %arg8[%c0_28, %c0_29] : memref<4x128xf32, #tpu.memory_space<vmem>>, vector<4x128xf32>
    tpu.vector_store %arg8[%c0_28, %c0_29], %87 {strides = array<i32>} : memref<4x128xf32, #tpu.memory_space<vmem>>, vector<4x128xf32>,
    %c0_30 = arith.constant 0 : index
    %c0_31 = arith.constant 0 : index
    %89 = vector.load %arg9[%c0_30, %c0_31] : memref<4x128xf32, #tpu.memory_space<vmem>>, vector<4x128xf32>
    %90 = arith.addf %89, %79 : vector<4x128xf32>
    %c0_32 = arith.constant 0 : index
    %c0_33 = arith.constant 0 : index
    %91 = vector.load %arg9[%c0_32, %c0_33] : memref<4x128xf32, #tpu.memory_space<vmem>>, vector<4x128xf32>
    tpu.vector_store %arg9[%c0_32, %c0_33], %90 {strides = array<i32>} : memref<4x128xf32, #tpu.memory_space<vmem>>, vector<4x128xf32>,
    %c0_34 = arith.constant 0 : index
    %c0_35 = arith.constant 0 : index
    %92 = vector.load %arg10[%c0_34, %c0_35] : memref<4x128xf32, #tpu.memory_space<vmem>>, vector<4x128xf32>
    %93 = arith.addf %92, %81 : vector<4x128xf32>
    %c0_36 = arith.constant 0 : index
    %c0_37 = arith.constant 0 : index
    %94 = vector.load %arg10[%c0_36, %c0_37] : memref<4x128xf32, #tpu.memory_space<vmem>>, vector<4x128xf32>
    tpu.vector_store %arg10[%c0_36, %c0_37], %93 {strides = array<i32>} : memref<4x128xf32, #tpu.memory_space<vmem>>, vector<4x128xf32>,
    %c0_38 = arith.constant 0 : index
    %c0_39 = arith.constant 0 : index
    %95 = vector.load %arg11[%c0_38, %c0_39] : memref<4x128xf32, #tpu.memory_space<vmem>>, vector<4x128xf32>
    %96 = arith.addf %95, %83 : vector<4x128xf32>
    %c0_40 = arith.constant 0 : index
    %c0_41 = arith.constant 0 : index
    %97 = vector.load %arg11[%c0_40, %c0_41] : memref<4x128xf32, #tpu.memory_space<vmem>>, vector<4x128xf32>
    tpu.vector_store %arg11[%c0_40, %c0_41], %96 {strides = array<i32>} : memref<4x128xf32, #tpu.memory_space<vmem>>, vector<4x128xf32>,
    %c0_42 = arith.constant 0 : index
    %c0_43 = arith.constant 0 : index
    %98 = vector.load %arg12[%c0_42, %c0_43] : memref<4x128xf32, #tpu.memory_space<vmem>>, vector<4x128xf32>
    %99 = arith.addf %98, %85 : vector<4x128xf32>
    %c0_44 = arith.constant 0 : index
    %c0_45 = arith.constant 0 : index
    %100 = vector.load %arg12[%c0_44, %c0_45] : memref<4x128xf32, #tpu.memory_space<vmem>>, vector<4x128xf32>
    tpu.vector_store %arg12[%c0_44, %c0_45], %99 {strides = array<i32>} : memref<4x128xf32, #tpu.memory_space<vmem>>, vector<4x128xf32>,
    %c1_i32_46 = arith.constant 1 : i32
    %101 = arith.cmpi eq, %arg1, %c1_i32_46 : i32
    %c0_i32_47 = arith.constant 0 : i32
    %102 = arith.cmpi eq, %arg2, %c0_i32_47 : i32
    %103 = arith.andi %101, %102 : i1
    %104 = arith.extui %103 : i1 to i32
    %c0_i32_48 = arith.constant 0 : i32
    %105 = arith.cmpi ne, %104, %c0_i32_48 : i32
    scf.if %105 {
      %c0_49 = arith.constant 0 : index
      %c0_50 = arith.constant 0 : index
      %106 = vector.load %arg7[%c0_49, %c0_50] : memref<1x256xf32, #tpu.memory_space<vmem>>, vector<1x256xf32>
      %c0_51 = arith.constant 0 : index
      %c0_52 = arith.constant 0 : index
      %c0_53 = arith.constant 0 : index
      %107 = vector.load %arg5[%c0_51, %c0_52, %c0_53] : memref<1x1x256xf32, #tpu.memory_space<vmem>>, vector<1x1x256xf32>
      %108 = vector.shape_cast %107 : vector<1x1x256xf32> to vector<1x256xf32>
      %109 = vector.shape_cast %106 : vector<1x256xf32> to vector<1x1x256xf32>
      tpu.vector_store %arg5[%c0_51, %c0_52, %c0_53], %109 {strides = array<i32>} : memref<1x1x256xf32, #tpu.memory_space<vmem>>, vector<1x1x256xf32>,
      %c0_54 = arith.constant 0 : index
      %c0_55 = arith.constant 0 : index
      %110 = vector.load %arg8[%c0_54, %c0_55] : memref<4x128xf32, #tpu.memory_space<vmem>>, vector<4x128xf32>
      %c0_56 = arith.constant 0 : index
      %c0_57 = arith.constant 0 : index
      %c0_58 = arith.constant 0 : index
      %c0_59 = arith.constant 0 : index
      %111 = vector.load %arg6[%c0_56, %c0_57, %c0_58, %c0_59] : memref<1x5x4x128xf32, #tpu.memory_space<vmem>>, vector<1x1x4x128xf32>
      %112 = vector.shape_cast %111 : vector<1x1x4x128xf32> to vector<4x128xf32>
      %113 = vector.shape_cast %110 : vector<4x128xf32> to vector<1x1x4x128xf32>
      tpu.vector_store %arg6[%c0_56, %c0_57, %c0_58, %c0_59], %113 {strides = array<i32>} : memref<1x5x4x128xf32, #tpu.memory_space<vmem>>, vector<1x1x4x128xf32>,
      %c0_60 = arith.constant 0 : index
      %c0_61 = arith.constant 0 : index
      %114 = vector.load %arg9[%c0_60, %c0_61] : memref<4x128xf32, #tpu.memory_space<vmem>>, vector<4x128xf32>
      %c0_62 = arith.constant 0 : index
      %c1 = arith.constant 1 : index
      %c0_63 = arith.constant 0 : index
      %c0_64 = arith.constant 0 : index
      %115 = vector.load %arg6[%c0_62, %c1, %c0_63, %c0_64] : memref<1x5x4x128xf32, #tpu.memory_space<vmem>>, vector<1x1x4x128xf32>
      %116 = vector.shape_cast %115 : vector<1x1x4x128xf32> to vector<4x128xf32>
      %117 = vector.shape_cast %114 : vector<4x128xf32> to vector<1x1x4x128xf32>
      tpu.vector_store %arg6[%c0_62, %c1, %c0_63, %c0_64], %117 {strides = array<i32>} : memref<1x5x4x128xf32, #tpu.memory_space<vmem>>, vector<1x1x4x128xf32>,
      %c0_65 = arith.constant 0 : index
      %c0_66 = arith.constant 0 : index
      %118 = vector.load %arg10[%c0_65, %c0_66] : memref<4x128xf32, #tpu.memory_space<vmem>>, vector<4x128xf32>
      %c0_67 = arith.constant 0 : index
      %c2 = arith.constant 2 : index
      %c0_68 = arith.constant 0 : index
      %c0_69 = arith.constant 0 : index
      %119 = vector.load %arg6[%c0_67, %c2, %c0_68, %c0_69] : memref<1x5x4x128xf32, #tpu.memory_space<vmem>>, vector<1x1x4x128xf32>
      %120 = vector.shape_cast %119 : vector<1x1x4x128xf32> to vector<4x128xf32>
      %121 = vector.shape_cast %118 : vector<4x128xf32> to vector<1x1x4x128xf32>
      tpu.vector_store %arg6[%c0_67, %c2, %c0_68, %c0_69], %121 {strides = array<i32>} : memref<1x5x4x128xf32, #tpu.memory_space<vmem>>, vector<1x1x4x128xf32>,
      %c0_70 = arith.constant 0 : index
      %c0_71 = arith.constant 0 : index
      %122 = vector.load %arg11[%c0_70, %c0_71] : memref<4x128xf32, #tpu.memory_space<vmem>>, vector<4x128xf32>
      %c0_72 = arith.constant 0 : index
      %c3 = arith.constant 3 : index
      %c0_73 = arith.constant 0 : index
      %c0_74 = arith.constant 0 : index
      %123 = vector.load %arg6[%c0_72, %c3, %c0_73, %c0_74] : memref<1x5x4x128xf32, #tpu.memory_space<vmem>>, vector<1x1x4x128xf32>
      %124 = vector.shape_cast %123 : vector<1x1x4x128xf32> to vector<4x128xf32>
      %125 = vector.shape_cast %122 : vector<4x128xf32> to vector<1x1x4x128xf32>
      tpu.vector_store %arg6[%c0_72, %c3, %c0_73, %c0_74], %125 {strides = array<i32>} : memref<1x5x4x128xf32, #tpu.memory_space<vmem>>, vector<1x1x4x128xf32>,
      %c0_75 = arith.constant 0 : index
      %c0_76 = arith.constant 0 : index
      %126 = vector.load %arg12[%c0_75, %c0_76] : memref<4x128xf32, #tpu.memory_space<vmem>>, vector<4x128xf32>
      %c0_77 = arith.constant 0 : index
      %c4 = arith.constant 4 : index
      %c0_78 = arith.constant 0 : index
      %c0_79 = arith.constant 0 : index
      %127 = vector.load %arg6[%c0_77, %c4, %c0_78, %c0_79] : memref<1x5x4x128xf32, #tpu.memory_space<vmem>>, vector<1x1x4x128xf32>
      %128 = vector.shape_cast %127 : vector<1x1x4x128xf32> to vector<4x128xf32>
      %129 = vector.shape_cast %126 : vector<4x128xf32> to vector<1x1x4x128xf32>
      tpu.vector_store %arg6[%c0_77, %c4, %c0_78, %c0_79], %129 {strides = array<i32>} : memref<1x5x4x128xf32, #tpu.memory_space<vmem>>, vector<1x1x4x128xf32>,
    } else {
    }
    return
  }
  func.func @transform_0(%arg0: i32, %arg1: i32, %arg2: i32) -> (i32, i32, i32) {
    %c1_i32 = arith.constant 1 : i32
    %0 = arith.muli %arg0, %c1_i32 : i32
    %1 = arith.addi %0, %arg2 : i32
    %c0_i32 = arith.constant 0 : i32
    %2 = arith.minsi %1, %c0_i32 : i32
    %c0_i32_0 = arith.constant 0 : i32
    %c0_i32_1 = arith.constant 0 : i32
    return %arg1, %c0_i32_0, %2 : i32, i32, i32
  }
  func.func @transform_1(%arg0: i32, %arg1: i32, %arg2: i32) -> (i32, i32, i32) {
    %c1_i32 = arith.constant 1 : i32
    %0 = arith.muli %arg0, %c1_i32 : i32
    %1 = arith.addi %0, %arg2 : i32
    %c0_i32 = arith.constant 0 : i32
    %2 = arith.minsi %1, %c0_i32 : i32
    %c0_i32_0 = arith.constant 0 : i32
    %c0_i32_1 = arith.constant 0 : i32
    return %arg1, %c0_i32_0, %2 : i32, i32, i32
  }
  func.func @transform_2(%arg0: i32, %arg1: i32, %arg2: i32) -> (i32, i32, i32) {
    %c0_i32 = arith.constant 0 : i32
    %c0_i32_0 = arith.constant 0 : i32
    %c0_i32_1 = arith.constant 0 : i32
    return %arg0, %c0_i32, %c0_i32_0 : i32, i32, i32
  }
  func.func @transform_3(%arg0: i32, %arg1: i32, %arg2: i32) -> (i32, i32, i32, i32) {
    %c0_i32 = arith.constant 0 : i32
    %c0_i32_0 = arith.constant 0 : i32
    %c0_i32_1 = arith.constant 0 : i32
    %c0_i32_2 = arith.constant 0 : i32
    return %arg0, %c0_i32, %c0_i32_0, %c0_i32_1 : i32, i32, i32, i32
  }
}

</mosaic_0001>

<llo_original>
// kernel: tpu_custom_call.1
$region0: #{tpu_custom_call.1}
  #allocation0 [shape = 'u32[]', space=smem, size = 0x4, offset = 0x4, fixed_abs, tag = 'smem constant byte address 0x4 - core index']
  #allocation1 [shape = 'u32[144,128]{1,0:T(1,128)}', space=vmem, size = 0x12000, scoped, tag = 'internal scratch']
  #allocation2 [shape = 'f32[1,256]{1,0:T(1,128)}', space=vmem, size = 0x400, scoped, tag = 'scratch operand']
  #allocation3 [shape = 'f32[4,128]{1,0:T(4,128)}', space=vmem, size = 0x800, scoped, tag = 'scratch operand']
  #allocation4 [shape = 'f32[4,128]{1,0:T(4,128)}', space=vmem, size = 0x800, scoped, tag = 'scratch operand']
  #allocation5 [shape = 'f32[4,128]{1,0:T(4,128)}', space=vmem, size = 0x800, scoped, tag = 'scratch operand']
  #allocation6 [shape = 'f32[4,128]{1,0:T(4,128)}', space=vmem, size = 0x800, scoped, tag = 'scratch operand']
  #allocation7 [shape = 'f32[4,128]{1,0:T(4,128)}', space=vmem, size = 0x800, scoped, tag = 'scratch operand']
  %s0 = inlined_call_operand.hbm [shape: f32[2,4,256], index: 0, kind: input, shape index: {}]
  %s1 = inlined_call_operand.hbm [shape: f32[2,4,256], index: 1, kind: input, shape index: {}]
  %s2 = inlined_call_operand.hbm [shape: f32[1,1,256], index: 2, kind: output, shape index: {0}]
  %s3 = inlined_call_operand.hbm [shape: f32[1,5,4,128], index: 3, kind: output, shape index: {1}]
  %4 = xla_tuple %s2, %s3
  %s5 = sld [smem:[#allocation0]]
  $region65: #{tpu_custom_call.1} parent=0
    _
  %s7 = ssub.s32 1, %s5
  %s8 = scalar_select 0, %s7, %s5
  $region1: #{tpu_custom_call.1} parent=0
    #allocation8 [shape = 'u8[8192]{0}', space=vmem, size = 0x2000, scoped, tag = 'input window, operand 0']
    #allocation9 [shape = 's32[2]{0}', space=sflag, size = 0x8, scoped, tag = 'scoped memory for tpu_custom_call.1']
    #allocation10 [shape = 's32[2]{0}', space=sflag, size = 0x8, scoped, tag = 'scoped memory for tpu_custom_call.1']
    #allocation11 [shape = 'u8[8192]{0}', space=vmem, size = 0x2000, scoped, tag = 'input window, operand 1']
    #allocation12 [shape = 's32[2]{0}', space=sflag, size = 0x8, scoped, tag = 'scoped memory for tpu_custom_call.1']
    #allocation13 [shape = 'u8[1024]{0}', space=vmem, size = 0x400, scoped, tag = 'output window, operand 0, single buffered']
    #allocation14 [shape = 'u8[10240]{0}', space=vmem, size = 0x2800, scoped, tag = 'output window, operand 1, single buffered']
    #allocation15 [shape = 's32[1]{0}', space=sflag, size = 0x4, scoped, tag = 'scoped memory for tpu_custom_call.1']
    %9 = vsyncpa [#allocation9], 0
    %s10 = scalar_lea.sflag [#allocation9], 1
    %11 = vsyncpa %s10, 0
    %12 = vsyncpa [#allocation12], 0
    %s13 = scalar_lea.sflag [#allocation12], 1
    %14 = vsyncpa %s13, 0
    %15 = vsyncpa [#allocation10], 0
    %16 = vsyncpa [#allocation15], 0
    loop: start=0, step=1, limit=4
    $region2: #{tpu_custom_call.1} parent=1 // loop_pre_header
      _
    $region3: #{tpu_custom_call.1} parent=1 // loop_header
      %s18 = sphi 0, %s22
      %p19 = scmp.ge.s32.totalorder %s18, 4
      %s25 = sphi 0, %s44
      %s26 = sphi 0, %s40
      %s27 = sphi 0, %s36
      %s28 = sphi 0, %s25
      %s29 = sphi 0, %s26
      %s30 = sphi 0, %s27
      %s31 = sphi 0, %s28
      %s32 = sphi 0, %s29
      %s33 = sphi 0, %s30
      %s55 = sphi 0, %s57
      %s58 = sphi 0, %s55
      %s59 = sphi 0, %s58
      %s75 = sphi 0, %s59
      %s89 = sphi 0, %s91
      %s92 = sphi 0, %s89
      %s93 = sphi 0, %s92
      %s109 = sphi 0, %s93
      %s115 = sphi 0, %s117
      %s118 = sphi 0, %s115
      %s119 = sphi 0, %s118
      %s135 = sphi 0, %s119
      %s141 = sphi 0, %s143
      %s144 = sphi 0, %s141
      %s145 = sphi 0, %s144
      %s161 = sphi 0, %s145
    $region4: #{tpu_custom_call.1} parent=1 // loop_header_branch
      %21 = sbr.rel (%p19) target = $region8
    $region5: #{tpu_custom_call.1} parent=1 // loop_body
      %s23 = ssub.s32 %s18, 1
      %s24 = ssub.s32 %s18, 2
      %s34 = sadd.s32 1, %s27
      %p35 = scmp.ge.s32.totalorder %s34, 1
      %s36 = scalar_select %p35, 0, %s34
      %s37 = sadd.s32 1, %s26
      %s38 = scalar_select %p35, %s37, %s26
      %p39 = scmp.ge.s32.totalorder %s38, 2
      %s40 = scalar_select %p39, 0, %s38
      %s41 = sadd.s32 1, %s25
      %s42 = scalar_select %p39, %s41, %s25
      %p43 = scmp.ge.s32.totalorder %s42, 1
      %s44 = scalar_select %p43, 0, %s42
      %s45 = sadd.s32 %s25, %s27
      %p46 = scmp.lt.s32.totalorder %s45, 0
      %s47 = scalar_select %p46, %s45, 0
      %s48 = sadd.s32 %s44, %s36
      %p49 = scmp.lt.s32.totalorder %s48, 0
      %s50 = scalar_select %p49, %s48, 0
      %s51 = ssub.s32 %s26, %s40
      %s52 = ssub.s32 %s47, %s50
      %s53 = sor.u32 %s51, %s52
      %p54 = scmp.eq.s32.totalorder %s53, 0
      %s56 = sadd.s32 %s55, 1
      %s57 = scalar_select %p54, %s55, %s56
      %p60 = pneg %p54
      %p61 = scmp.eq.s32.totalorder %s18, 1
      %p62 = por %p60, %p61
      %p63 = scmp.ne.s32.totalorder %s55, %s58
      %p64 = scmp.eq.s32.totalorder %s18, 0
      %p65 = por %p63, %p64
      %p66 = scmp.ne.s32.totalorder %s55, %s58
      %p67 = scmp.eq.s32.totalorder %s23, 1
      %p68 = por %p66, %p67
      %p69 = scmp.ne.s32.totalorder %s58, %s59
      %p70 = scmp.eq.s32.totalorder %s23, 0
      %p71 = por %p69, %p70
      %p72 = scmp.ne.s32.totalorder %s58, %s59
      %p73 = scmp.eq.s32.totalorder %s24, 1
      %p74 = por %p72, %p73
      %p76 = scmp.ne.s32.totalorder %s59, %s75
      %p77 = scmp.eq.s32.totalorder %s24, 0
      %p78 = por %p76, %p77
      %s79 = sadd.s32 %s25, %s27
      %p80 = scmp.lt.s32.totalorder %s79, 0
      %s81 = scalar_select %p80, %s79, 0
      %s82 = sadd.s32 %s44, %s36
      %p83 = scmp.lt.s32.totalorder %s82, 0
      %s84 = scalar_select %p83, %s82, 0
      %s85 = ssub.s32 %s26, %s40
      %s86 = ssub.s32 %s81, %s84
      %s87 = sor.u32 %s85, %s86
      %p88 = scmp.eq.s32.totalorder %s87, 0
      %s90 = sadd.s32 %s89, 1
      %s91 = scalar_select %p88, %s89, %s90
      %p94 = pneg %p88
      %p95 = scmp.eq.s32.totalorder %s18, 1
      %p96 = por %p94, %p95
      %p97 = scmp.ne.s32.totalorder %s89, %s92
      %p98 = scmp.eq.s32.totalorder %s18, 0
      %p99 = por %p97, %p98
      %p100 = scmp.ne.s32.totalorder %s89, %s92
      %p101 = scmp.eq.s32.totalorder %s23, 1
      %p102 = por %p100, %p101
      %p103 = scmp.ne.s32.totalorder %s92, %s93
      %p104 = scmp.eq.s32.totalorder %s23, 0
      %p105 = por %p103, %p104
      %p106 = scmp.ne.s32.totalorder %s92, %s93
      %p107 = scmp.eq.s32.totalorder %s24, 1
      %p108 = por %p106, %p107
      %p110 = scmp.ne.s32.totalorder %s93, %s109
      %p111 = scmp.eq.s32.totalorder %s24, 0
      %p112 = por %p110, %p111
      %s113 = ssub.s32 %s25, %s44
      %p114 = scmp.eq.s32.totalorder %s113, 0
      %s116 = sadd.s32 %s115, 1
      %s117 = scalar_select %p114, %s115, %s116
      %p120 = pneg %p114
      %p121 = scmp.eq.s32.totalorder %s18, 1
      %p122 = por %p120, %p121
      %p123 = scmp.ne.s32.totalorder %s115, %s118
      %p124 = scmp.eq.s32.totalorder %s18, 0
      %p125 = por %p123, %p124
      %p126 = scmp.ne.s32.totalorder %s115, %s118
      %p127 = scmp.eq.s32.totalorder %s23, 1
      %p128 = por %p126, %p127
      %p129 = scmp.ne.s32.totalorder %s118, %s119
      %p130 = scmp.eq.s32.totalorder %s23, 0
      %p131 = por %p129, %p130
      %p132 = scmp.ne.s32.totalorder %s118, %s119
      %p133 = scmp.eq.s32.totalorder %s24, 1
      %p134 = por %p132, %p133
      %p136 = scmp.ne.s32.totalorder %s119, %s135
      %p137 = scmp.eq.s32.totalorder %s24, 0
      %p138 = por %p136, %p137
      %s139 = ssub.s32 %s25, %s44
      %p140 = scmp.eq.s32.totalorder %s139, 0
      %s142 = sadd.s32 %s141, 1
      %s143 = scalar_select %p140, %s141, %s142
      %p146 = pneg %p140
      %p147 = scmp.eq.s32.totalorder %s18, 1
      %p148 = por %p146, %p147
      %p149 = scmp.ne.s32.totalorder %s141, %s144
      %p150 = scmp.eq.s32.totalorder %s18, 0
      %p151 = por %p149, %p150
      %p152 = scmp.ne.s32.totalorder %s141, %s144
      %p153 = scmp.eq.s32.totalorder %s23, 1
      %p154 = por %p152, %p153
      %p155 = scmp.ne.s32.totalorder %s144, %s145
      %p156 = scmp.eq.s32.totalorder %s23, 0
      %p157 = por %p155, %p156
      %p158 = scmp.ne.s32.totalorder %s144, %s145
      %p159 = scmp.eq.s32.totalorder %s24, 1
      %p160 = por %p158, %p159
      %p162 = scmp.ne.s32.totalorder %s145, %s161
      %p163 = scmp.eq.s32.totalorder %s24, 0
      %p164 = por %p162, %p163
      %p165 = scmp.le.s32.totalorder 1, %s18
      %p166 = scmp.lt.s32.totalorder %s18, 3
      %p167 = pnand %p165, %p166
      %p168 = pneg %p167
      // Predicated region
      $region9: #{tpu_custom_call.1} parent=5 // pred_check
        _
      $region10: #{tpu_custom_call.1} parent=5 // pred_check_branch
        %170 = sbr.rel (%p167) target = $region12
      $region11: #{tpu_custom_call.1} parent=5 // pred_region
        %s171 = ssub.s32 %s18, 1
      $region12: #{tpu_custom_call.1} parent=5 // pred_fallthru
        _
      %p172 = scmp.lt.s32.totalorder %s18, 2
      // Predicated region
      $region13: #{tpu_custom_call.1} parent=5 // pred_check
        %p173 = pneg %p172
      $region14: #{tpu_custom_call.1} parent=5 // pred_check_branch
        %175 = sbr.rel (%p173) target = $region16
      $region15: #{tpu_custom_call.1} parent=5 // pred_region
        // Predicated region
        $region17: #{tpu_custom_call.1} parent=15 // pred_check
          %p176 = pneg %p65
        $region18: #{tpu_custom_call.1} parent=15 // pred_check_branch
          %178 = sbr.rel (%p176) target = $region20
        $region19: #{tpu_custom_call.1} parent=15 // pred_region
          %s179 = sand.u32 %s55, 1
          %s180 = scalar_lea.sflag [#allocation9], %s179
          %s181 = sand.u32 %s55, 1
          %s182 = smul.addr %s181, 8
          %s183 = scalar_lea.vmem [#allocation8], %s182
          %s184 = sadd.s32 %s25, %s27
          %p185 = scmp.lt.s32.totalorder %s184, 0
          %s186 = scalar_select %p185, %s184, 0
          %s187 = smul.u32 2, %s186
          %s189 = ssub.s32 128, 128
          %190 = vsyncadd %s180, %s189
          %s191 = smul.addr %s26, 2
          %s192 = sadd.s32 %s187, %s191
          %s193 = smul.addr %s192, 64
          %s194 = scalar_lea.hbm %s0, %s193
          %s196 = sshll.u32 %s183, 4
          %s197 = int_to_ptr.vmem [resolvable:$true] %s196
          %199 = dma.hbm_to_vmem [thread:$0]  %s194, 128, %s197, %s180
        $region20: #{tpu_custom_call.1} parent=15 // pred_fallthru
          _
        // Predicated region
        $region21: #{tpu_custom_call.1} parent=15 // pred_check
          %p200 = pneg %p99
        $region22: #{tpu_custom_call.1} parent=15 // pred_check_branch
          %202 = sbr.rel (%p200) target = $region24
        $region23: #{tpu_custom_call.1} parent=15 // pred_region
          %s203 = sand.u32 %s89, 1
          %s204 = scalar_lea.sflag [#allocation12], %s203
          %s205 = sand.u32 %s89, 1
          %s206 = smul.addr %s205, 8
          %s207 = scalar_lea.vmem [#allocation11], %s206
          %s208 = sadd.s32 %s25, %s27
          %p209 = scmp.lt.s32.totalorder %s208, 0
          %s210 = scalar_select %p209, %s208, 0
          %s211 = smul.u32 2, %s210
          %s213 = ssub.s32 128, 128
          %214 = vsyncadd %s204, %s213
          %s215 = smul.addr %s26, 2
          %s216 = sadd.s32 %s211, %s215
          %s217 = smul.addr %s216, 64
          %s218 = scalar_lea.hbm %s1, %s217
          %s220 = sshll.u32 %s207, 4
          %s221 = int_to_ptr.vmem [resolvable:$true] %s220
          %223 = dma.hbm_to_vmem [thread:$0]  %s218, 128, %s221, %s204
        $region24: #{tpu_custom_call.1} parent=15 // pred_fallthru
          _
      $region16: #{tpu_custom_call.1} parent=5 // pred_fallthru
        _
      %p224 = scmp.le.s32.totalorder 1, %s18
      %p225 = scmp.lt.s32.totalorder %s18, 3
      %p226 = pnand %p224, %p225
      %p227 = pneg %p226
      // Predicated region
      $region25: #{tpu_custom_call.1} parent=5 // pred_check
        _
      $region26: #{tpu_custom_call.1} parent=5 // pred_check_branch
        %229 = sbr.rel (%p226) target = $region28
      $region27: #{tpu_custom_call.1} parent=5 // pred_region
        %s230 = ssub.s32 %s18, 1
        %s231 = sand.u32 %s58, 1
        %s232 = scalar_lea.sflag [#allocation9], %s231
        %s233 = sand.u32 %s58, 1
        %s234 = smul.addr %s233, 8
        %s235 = scalar_lea.vmem [#allocation8], %s234
        // Predicated region
        $region29: #{tpu_custom_call.1} parent=27 // pred_check
          %p236 = pneg %p71
        $region30: #{tpu_custom_call.1} parent=27 // pred_check_branch
          %238 = sbr.rel (%p236) target = $region32
        $region31: #{tpu_custom_call.1} parent=27 // pred_region
          %239 = dma.done %s232, 128
        $region32: #{tpu_custom_call.1} parent=27 // pred_fallthru
          _
        %s240 = sand.u32 %s92, 1
        %s241 = scalar_lea.sflag [#allocation12], %s240
        %s242 = sand.u32 %s92, 1
        %s243 = smul.addr %s242, 8
        %s244 = scalar_lea.vmem [#allocation11], %s243
        // Predicated region
        $region33: #{tpu_custom_call.1} parent=27 // pred_check
          %p245 = pneg %p105
        $region34: #{tpu_custom_call.1} parent=27 // pred_check_branch
          %247 = sbr.rel (%p245) target = $region36
        $region35: #{tpu_custom_call.1} parent=27 // pred_region
          %248 = dma.done %s241, 128
        $region36: #{tpu_custom_call.1} parent=27 // pred_fallthru
          _
        %s249 = sand.u32 %s58, 1
        %s250 = scalar_lea.sflag [#allocation9], %s249
        %s251 = sand.u32 %s58, 1
        %s252 = smul.addr %s251, 8
        %s253 = scalar_lea.vmem [#allocation8], %s252
        %p254 = pneg %p71
        %p255 = pneg %p68
        %s256 = sand.u32 %s92, 1
        %s257 = scalar_lea.sflag [#allocation12], %s256
        %s258 = sand.u32 %s92, 1
        %s259 = smul.addr %s258, 8
        %s260 = scalar_lea.vmem [#allocation11], %s259
        %p261 = pneg %p105
        %p262 = pneg %p102
        %p263 = pneg %p131
        %p264 = pneg %p128
        %p265 = pneg %p157
        %p266 = pneg %p154
        %s267 = sadd.s32 %s28, %s30
        %p268 = scmp.lt.s32.totalorder %s267, 0
        %s269 = scalar_select %p268, %s267, 0
        %s270 = smul.u32 2, %s269
        %s271 = sadd.s32 %s28, %s30
        %p272 = scmp.lt.s32.totalorder %s271, 0
        %s273 = scalar_select %p272, %s271, 0
        %s274 = smul.u32 2, %s273
        %p275 = scmp.eq.s32.totalorder %s29, 0
        %p276 = scmp.eq.s32.totalorder %s30, 0
        %p277 = pnand %p275, %p276
        %p278 = pneg %p277
        // Predicated region
        $region37: #{tpu_custom_call.1} parent=27 // pred_check
          _
        $region38: #{tpu_custom_call.1} parent=27 // pred_check_branch
          %280 = sbr.rel (%p277) target = $region40
        $region39: #{tpu_custom_call.1} parent=27 // pred_region
          %v281 = vlaneseq
          %vm282 = vcmp.ge.s32.totalorder %v281, 0
          %vm283 = vcmp.lt.s32.totalorder %v281, 256
          %vm284 = vmand %vm282, %vm283
          %285 = vst.msk [vmem:[#allocation2] sm:$0x3] %vm284, 0.0
          %286 = vst [vmem:[#allocation3] sm:$0xf] 0.0
          %287 = vst [vmem:[#allocation4] sm:$0xf] 0.0
          %288 = vst [vmem:[#allocation5] sm:$0xf] 0.0
          %289 = vst [vmem:[#allocation6] sm:$0xf] 0.0
          %290 = vst [vmem:[#allocation7] sm:$0xf] 0.0
        $region40: #{tpu_custom_call.1} parent=27 // pred_fallthru
          _
        %s291 = sadd.s32 %s28, %s30
        %v292 = vlaneseq
        %v293 = vand.u32 %v292, 127
        %v294 = vadd.s32 %v293, 128
        %s295 = smul.u32 %s291, 256
        %v296 = vstv %s295
        %v297 = vadd.s32 %v296, %v293
        %v298 = vadd.s32 %v296, %v294
        %vm299 = vcmp.lt.s32.totalorder %v297, 256
        %vm300 = vcmp.lt.s32.totalorder %v298, 256
        %v301 = vld [vmem:[%s235] sm:$0xff]
        %v302 = vld [vmem:[%s244] sm:$0xff]
        %v304 = vcombine.high %v301, %v301
        %vm306 = vcmask 1043456
        %v307 = vsel %vm306, %v301, -inf
        %v308 = vrot.slane %v307, 4
        %v309 = vmax.f32 %v307, %v308
        %v310 = vrot.slane %v309, 2
        %v311 = vmax.f32 %v309, %v310
        %v312 = vrot.slane %v311, 1
        %v313 = vmax.f32 %v311, %v312
        %v314 = vsel %vm306, %v304, -inf
        %v315 = vrot.slane %v314, 4
        %v316 = vmax.f32 %v314, %v315
        %v317 = vrot.slane %v316, 2
        %v318 = vmax.f32 %v316, %v317
        %v319 = vrot.slane %v318, 1
        %v320 = vmax.f32 %v318, %v319
        %v323 = vcombine.low %v313, %v320
        %v325 = vsub.f32 %v301, %v323
        %v326 = vmul.f32 %v325, 1.442695
        %v327 = vpow.pop %v326
        %v329 = vcombine.high %v327, %v327
        %v331 = vsel %vm306, %v327, 0.0
        %v332 = vrot.slane %v331, 4
        %v333 = vadd.f32 %v331, %v332
        %v334 = vrot.slane %v333, 2
        %v335 = vadd.f32 %v333, %v334
        %v336 = vrot.slane %v335, 1
        %v337 = vadd.f32 %v335, %v336
        %v338 = vsel %vm306, %v329, 0.0
        %v339 = vrot.slane %v338, 4
        %v340 = vadd.f32 %v338, %v339
        %v341 = vrot.slane %v340, 2
        %v342 = vadd.f32 %v340, %v341
        %v343 = vrot.slane %v342, 1
        %v344 = vadd.f32 %v342, %v343
        %v345 = vrcp.pop %v337
        %v346 = vmul.f32 1.0, %v345
        %v347 = vrcp.pop %v344
        %v348 = vmul.f32 1.0, %v347
        %v351 = vcombine.low %v346, %v348
        %v353 = vmul.f32 %v327, %v351
        %v355 = vcombine.high %v302, %v302
        %v357 = vsel %vm306, %v302, -inf
        %v358 = vrot.slane %v357, 4
        %v359 = vmax.f32 %v357, %v358
        %v360 = vrot.slane %v359, 2
        %v361 = vmax.f32 %v359, %v360
        %v362 = vrot.slane %v361, 1
        %v363 = vmax.f32 %v361, %v362
        %v364 = vsel %vm306, %v355, -inf
        %v365 = vrot.slane %v364, 4
        %v366 = vmax.f32 %v364, %v365
        %v367 = vrot.slane %v366, 2
        %v368 = vmax.f32 %v366, %v367
        %v369 = vrot.slane %v368, 1
        %v370 = vmax.f32 %v368, %v369
        %v373 = vcombine.low %v363, %v370
        %v375 = vsub.f32 %v302, %v373
        %v376 = vmul.f32 %v375, 1.442695
        %v377 = vpow.pop %v376
        %v379 = vcombine.high %v377, %v377
        %v381 = vsel %vm306, %v377, 0.0
        %v382 = vrot.slane %v381, 4
        %v383 = vadd.f32 %v381, %v382
        %v384 = vrot.slane %v383, 2
        %v385 = vadd.f32 %v383, %v384
        %v386 = vrot.slane %v385, 1
        %v387 = vadd.f32 %v385, %v386
        %v388 = vsel %vm306, %v379, 0.0
        %v389 = vrot.slane %v388, 4
        %v390 = vadd.f32 %v388, %v389
        %v391 = vrot.slane %v390, 2
        %v392 = vadd.f32 %v390, %v391
        %v393 = vrot.slane %v392, 1
        %v394 = vadd.f32 %v392, %v393
        %v395 = vrcp.pop %v387
        %v396 = vmul.f32 1.0, %v395
        %v397 = vrcp.pop %v394
        %v398 = vmul.f32 1.0, %v397
        %v401 = vcombine.low %v396, %v398
        %v403 = vmul.f32 %v377, %v401
        %v404 = vmul.f32 %v353, %v403
        %v406 = vcombine.high %v404, %v404
        %v408 = vsel %vm306, %v404, 0.0
        %v409 = vrot.slane %v408, 4
        %v410 = vadd.f32 %v408, %v409
        %v411 = vrot.slane %v410, 2
        %v412 = vadd.f32 %v410, %v411
        %v413 = vrot.slane %v412, 1
        %v414 = vadd.f32 %v412, %v413
        %v415 = vsel %vm306, %v406, 0.0
        %v416 = vrot.slane %v415, 4
        %v417 = vadd.f32 %v415, %v416
        %v418 = vrot.slane %v417, 2
        %v419 = vadd.f32 %v417, %v418
        %v420 = vrot.slane %v419, 1
        %v421 = vadd.f32 %v419, %v420
        %v422 = vmul.f32 %v353, %v353
        %v424 = vcombine.high %v422, %v422
        %v426 = vsel %vm306, %v422, 0.0
        %v427 = vrot.slane %v426, 4
        %v428 = vadd.f32 %v426, %v427
        %v429 = vrot.slane %v428, 2
        %v430 = vadd.f32 %v428, %v429
        %v431 = vrot.slane %v430, 1
        %v432 = vadd.f32 %v430, %v431
        %v433 = vsel %vm306, %v424, 0.0
        %v434 = vrot.slane %v433, 4
        %v435 = vadd.f32 %v433, %v434
        %v436 = vrot.slane %v435, 2
        %v437 = vadd.f32 %v435, %v436
        %v438 = vrot.slane %v437, 1
        %v439 = vadd.f32 %v437, %v438
        %v440 = vmul.f32 %v403, %v403
        %v442 = vcombine.high %v440, %v440
        %v444 = vsel %vm306, %v440, 0.0
        %v445 = vrot.slane %v444, 4
        %v446 = vadd.f32 %v444, %v445
        %v447 = vrot.slane %v446, 2
        %v448 = vadd.f32 %v446, %v447
        %v449 = vrot.slane %v448, 1
        %v450 = vadd.f32 %v448, %v449
        %v451 = vsel %vm306, %v442, 0.0
        %v452 = vrot.slane %v451, 4
        %v453 = vadd.f32 %v451, %v452
        %v454 = vrot.slane %v453, 2
        %v455 = vadd.f32 %v453, %v454
        %v456 = vrot.slane %v455, 1
        %v457 = vadd.f32 %v455, %v456
        %v458 = vmul.f32 %v432, %v450
        %v459 = vmul.f32 %v439, %v457
        %v460 = vrsqrt.pop %v458
        %v461 = vmul.f32 %v458, %v460
        %vm462 = vcmp.eq.f32.partialorder %v458, inf
        %v463 = vsel %vm462, %v458, %v461
        %vm464 = vcmp.eq.f32.partialorder %v458, 0.0
        %v465 = vand.u32 %v458, 2147483648
        %v466 = vsel %vm464, %v465, %v463
        %v467 = vrsqrt.pop %v459
        %v468 = vmul.f32 %v459, %v467
        %vm469 = vcmp.eq.f32.partialorder %v459, inf
        %v470 = vsel %vm469, %v459, %v468
        %vm471 = vcmp.eq.f32.partialorder %v459, 0.0
        %v472 = vand.u32 %v459, 2147483648
        %v473 = vsel %vm471, %v472, %v470
        %v474 = vadd.f32 %v466, 1e-08
        %v475 = vadd.f32 %v473, 1e-08
        %v476 = vrcp.pop %v474
        %v477 = vmul.f32 %v414, %v476
        %v478 = vrcp.pop %v475
        %v479 = vmul.f32 %v421, %v478
        %v480 = vadd.f32 %v477, 1e-08
        %v481 = vadd.f32 %v479, 1e-08
        %v482 = vlog2.pop %v480
        %v483 = vmul.f32 %v482, 0.6931472
        %v484 = vlog2.pop %v481
        %v485 = vmul.f32 %v484, 0.6931472
        %v486 = vsub.f32 0.0, %v483
        %v487 = vsub.f32 0.0, %v485
        %v488 = vld [vmem:[#allocation2] sm:$0x3]
        %v489 = vsel %vm299, %v486, 0.0
        %v490 = vsel %vm300, %v487, 0.0
        %v493 = vcombine.low %v489, %v490
        %v495 = vunpack.c.l.s4 1966171168
        %v496 = vunpack.c.0.s8 %v495
        %v497 = vlaneseq
        %v498 = vshrl.u32 %v497, 7
        %v499 = vsub.s32 %v496, %v498
        %v500 = vrot.slane %v493, %v499
        %v502 = vunpack.c.l.s4 1966171168
        %v503 = vunpack.c.0.s8 %v502
        %v504 = vlaneseq
        %v505 = vshrl.u32 %v504, 7
        %v506 = vsub.s32 %v503, %v505
        %v507 = vrot.slane %v500, %v506
        %v509 = vadd.f32 %v488, %v507
        %v510 = vlaneseq
        %vm511 = vcmp.ge.s32.totalorder %v510, 0
        %vm512 = vcmp.lt.s32.totalorder %v510, 256
        %vm513 = vmand %vm511, %vm512
        %514 = vst.msk [vmem:[#allocation2] sm:$0x3] %vm513, %v509
        %v515 = vsel %vm299, 1, 0
        %v516 = vsel %vm300, 1, 0
        %vm517 = vcmp.eq.s32.totalorder %v515, 1
        %vm518 = vcmp.eq.s32.totalorder %v516, 1
        %v520 = vcombine.high %v353, %v353
        %v522 = vsel %vm517, %v353, 0.0
        %v523 = vsel %vm518, %v520, 0.0
        %v525 = vcombine.high %v403, %v403
        %v527 = vsel %vm517, %v403, 0.0
        %v528 = vsel %vm518, %v525, 0.0
        %v529 = vmul.f32 %v522, %v527
        %v530 = vmul.f32 %v522, %v522
        %v531 = vmul.f32 %v527, %v527
        %v532 = vadd.f32 %v522, %v523
        %v533 = vadd.f32 %v527, %v528
        %v534 = vmul.f32 %v523, %v528
        %v535 = vadd.f32 %v529, %v534
        %v536 = vmul.f32 %v523, %v523
        %v537 = vadd.f32 %v530, %v536
        %v538 = vmul.f32 %v528, %v528
        %v539 = vadd.f32 %v531, %v538
        %v540 = vld [vmem:[#allocation3] sm:$0xf]
        %v541 = vadd.f32 %v540, %v532
        %542 = vst [vmem:[#allocation3] sm:$0xf] %v541
        %v543 = vld [vmem:[#allocation4] sm:$0xf]
        %v544 = vadd.f32 %v543, %v533
        %545 = vst [vmem:[#allocation4] sm:$0xf] %v544
        %v546 = vld [vmem:[#allocation5] sm:$0xf]
        %v547 = vadd.f32 %v546, %v535
        %548 = vst [vmem:[#allocation5] sm:$0xf] %v547
        %v549 = vld [vmem:[#allocation6] sm:$0xf]
        %v550 = vadd.f32 %v549, %v537
        %551 = vst [vmem:[#allocation6] sm:$0xf] %v550
        %v552 = vld [vmem:[#allocation7] sm:$0xf]
        %v553 = vadd.f32 %v552, %v539
        %554 = vst [vmem:[#allocation7] sm:$0xf] %v553
        %p555 = scmp.eq.s32.totalorder %s29, 1
        %p556 = pnand %p555, %p276
        %p557 = pneg %p556
        // Predicated region
        $region41: #{tpu_custom_call.1} parent=27 // pred_check
          _
        $region42: #{tpu_custom_call.1} parent=27 // pred_check_branch
          %559 = sbr.rel (%p556) target = $region44
        $region43: #{tpu_custom_call.1} parent=27 // pred_region
          %v560 = vld [vmem:[#allocation2] sm:$0x3]
          %561 = vst.msk [vmem:[#allocation13] sm:$0x3] %vm513, %v560
          %v562 = vld [vmem:[#allocation3] sm:$0xf]
          %563 = vst [vmem:[#allocation14] sm:$0xf] %v562
          %v564 = vld [vmem:[#allocation4] sm:$0xf]
          %s565 = scalar_lea.vmem [#allocation14], 4
          %566 = vst [vmem:[%s565] sm:$0xf] %v564
          %v567 = vld [vmem:[#allocation5] sm:$0xf]
          %s568 = scalar_lea.vmem [#allocation14], 8
          %569 = vst [vmem:[%s568] sm:$0xf] %v567
          %v570 = vld [vmem:[#allocation6] sm:$0xf]
          %s571 = scalar_lea.vmem [#allocation14], 12
          %572 = vst [vmem:[%s571] sm:$0xf] %v570
          %v573 = vld [vmem:[#allocation7] sm:$0xf]
          %s574 = scalar_lea.vmem [#allocation14], 16
          %575 = vst [vmem:[%s574] sm:$0xf] %v573
        $region44: #{tpu_custom_call.1} parent=27 // pred_fallthru
          _
        // Predicated region
        $region45: #{tpu_custom_call.1} parent=27 // pred_check
          %p576 = pneg %p128
        $region46: #{tpu_custom_call.1} parent=27 // pred_check_branch
          %578 = sbr.rel (%p576) target = $region48
        $region47: #{tpu_custom_call.1} parent=27 // pred_region
          %s580 = ssub.s32 32, 32
          %581 = vsyncadd [#allocation10], %s580
          %s582 = smul.addr %s28, 2
          %s583 = smul.addr %s582, 16
          %s584 = scalar_lea.hbm %s2, %s583
          %s586 = sshll.u32 [#allocation13], 4
          %s587 = int_to_ptr.vmem [resolvable:$true] %s586
          %589 = dma.vmem_to_hbm [thread:$0]  %s587, 32, %s584, [#allocation10]
        $region48: #{tpu_custom_call.1} parent=27 // pred_fallthru
          _
        // Predicated region
        $region49: #{tpu_custom_call.1} parent=27 // pred_check
          %p590 = pneg %p154
        $region50: #{tpu_custom_call.1} parent=27 // pred_check_branch
          %592 = sbr.rel (%p590) target = $region52
        $region51: #{tpu_custom_call.1} parent=27 // pred_region
          %s594 = ssub.s32 320, 320
          %595 = vsyncadd [#allocation15], %s594
          %s596 = smul.addr %s28, 5
          %s597 = smul.addr %s596, 64
          %s598 = scalar_lea.hbm %s3, %s597
          %s599 = sshll.u32 [#allocation14], 4
          %s600 = int_to_ptr.vmem [resolvable:$true] %s599
          %605 = dma.vmem_to_hbm [thread:$0]  %s600, 320, %s598, [#allocation15], 64, 64, 4
        $region52: #{tpu_custom_call.1} parent=27 // pred_fallthru
          _
        // Predicated region
        $region53: #{tpu_custom_call.1} parent=27 // pred_check
          %p606 = pneg %p128
        $region54: #{tpu_custom_call.1} parent=27 // pred_check_branch
          %608 = sbr.rel (%p606) target = $region56
        $region55: #{tpu_custom_call.1} parent=27 // pred_region
          %609 = dma.done [#allocation10], 32
        $region56: #{tpu_custom_call.1} parent=27 // pred_fallthru
          _
        // Predicated region
        $region57: #{tpu_custom_call.1} parent=27 // pred_check
          %p610 = pneg %p154
        $region58: #{tpu_custom_call.1} parent=27 // pred_check_branch
          %612 = sbr.rel (%p610) target = $region60
        $region59: #{tpu_custom_call.1} parent=27 // pred_region
          %613 = dma.done [#allocation15], 320
        $region60: #{tpu_custom_call.1} parent=27 // pred_fallthru
          _
      $region28: #{tpu_custom_call.1} parent=5 // pred_fallthru
        _
      %p614 = scmp.le.s32.totalorder 2, %s18
      // Predicated region
      $region61: #{tpu_custom_call.1} parent=5 // pred_check
        %p615 = pneg %p614
      $region62: #{tpu_custom_call.1} parent=5 // pred_check_branch
        %617 = sbr.rel (%p615) target = $region64
      $region63: #{tpu_custom_call.1} parent=5 // pred_region
        %s618 = ssub.s32 %s18, 2
      $region64: #{tpu_custom_call.1} parent=5 // pred_fallthru
        _
    $region6: #{tpu_custom_call.1} parent=1 // loop_footer
      %s22 = sadd.s32 1, %s18
    $region7: #{tpu_custom_call.1} parent=1 // loop_footer_branch
      %17 = sbr.rel target = $region3
    $region8: #{tpu_custom_call.1} parent=1 // loop_exit
      _
    %619 = vsyncpa [#allocation9], 1
    %s620 = scalar_lea.sflag [#allocation9], 1
    %621 = vsyncpa %s620, 1
    %622 = vsyncpa [#allocation12], 1
    %s623 = scalar_lea.sflag [#allocation12], 1
    %624 = vsyncpa %s623, 1
    %625 = vsyncpa [#allocation10], 1
    %s626 = scalar_lea.sflag [#allocation10], 1
    %627 = vsyncpa %s626, 1
    %628 = vsyncpa [#allocation15], 1

</llo_original>
